<compile_context>
chip_gen: v5e
topology: v5e:2x2
jax: 0.10.0
libtpu: 0.0.40
codegen_flags: <defaults>
</compile_context>

<pallas_src>
import jax
import jax.numpy as jnp
from jax.experimental import pallas as pl
from jax.experimental.pallas import tpu as pltpu

LANE = 128                                 # TPU lane width
_TARGET_BLOCK_BYTES = 2 * 1024 * 1024      # ~2 MiB input blocks -> near HBM roofline
_VMEM_BUDGET_BYTES = 24 * 1024 * 1024      # total working-set clamp (safe across v5e/v6e/v7x)


def _softmax_dim0_kernel(x_ref, o_ref):
    # Upcast to f32 for exp + cross-sublane sum (correct numerics for bf16 in).
    x = x_ref[...].astype(jnp.float32)
    e = jnp.exp(x)                                # EUP transcendental
    denom = jnp.sum(e, axis=0, keepdims=True)     # XLU cross-sublane reduce -> (1, tile_n)
    inv = 1.0 / denom                             # exact per-column reciprocal (cols sum to 1)
    o_ref[...] = (e * inv).astype(o_ref.dtype)    # VPU broadcast multiply, lane-dense store


def _pick_tile_n(S: int, N: int, itemsize: int) -> int:
    """Column-tile width: MB-scale blocks, >=2 tiles when possible, VMEM-safe."""
    if N <= LANE:
        return N  # single full-extent block (block_shape == array dims is allowed)
    # Target ~2 MiB per input block, rounded down to a lane multiple.
    tile = max(LANE, (_TARGET_BLOCK_BYTES // max(S * itemsize, 1)) // LANE * LANE)
    # Clamp so the working set (2x double-buffered in + 2x out blocks in the io
    # dtype plus ~3 live f32 intermediates) fits the per-generation VMEM budget.
    per_col_bytes = S * (4 * itemsize + 3 * 4)
    tile = min(tile, max(LANE, (_VMEM_BUDGET_BYTES // max(per_col_bytes, 1)) // LANE * LANE))
    # Never exceed the lane-rounded width.
    n_lane_tiles = pl.cdiv(N, LANE)
    tile = min(tile, n_lane_tiles * LANE)
    # Keep at least two column tiles so v7x's two TensorCores both get work.
    if n_lane_tiles >= 2:
        tile = min(tile, pl.cdiv(n_lane_tiles, 2) * LANE)
    return tile


def softmax_dim0(x: jax.Array) -> jax.Array:
    """Softmax over axis 0: exp(x) / sum(exp(x), axis=0) (unstabilized, per spec)."""
    orig_shape = x.shape
    if x.ndim == 1:
        x2 = x.reshape(x.shape[0], 1)
    elif x.ndim == 2:
        x2 = x
    else:
        # torch's dim=0 sum broadcasts over all trailing dims -> flatten them.
        x2 = x.reshape(x.shape[0], -1)

    S, N = x2.shape
    itemsize = jnp.dtype(x2.dtype).itemsize
    tile_n = _pick_tile_n(S, N, itemsize)

    # TODO(synk): if S ever grows so large that even a full-seq (S, 128) f32
    # working set exceeds the VMEM budget, switch to a two-pass form with the
    # seq axis as a trailing "arbitrary" grid dim and a (1, tile_n) denom scratch.

    out = pl.pallas_call(
        _softmax_dim0_kernel,
        out_shape=jax.ShapeDtypeStruct((S, N), x2.dtype),
        grid=(pl.cdiv(N, tile_n),),                 # boundary block masked by Pallas, no pad
        in_specs=[pl.BlockSpec((S, tile_n), lambda j: (0, j))],
        out_specs=pl.BlockSpec((S, tile_n), lambda j: (0, j)),
        compiler_params=pltpu.CompilerParams(
            dimension_semantics=("parallel",),      # shard column tiles across TCs (v7x)
            vmem_limit_bytes=32 * 1024 * 1024,      # comfortable on all generations
        ),
        cost_estimate=pl.CostEstimate(
            flops=3 * S * N,                        # sum + mul (+ cast), order-of-magnitude hint
            transcendentals=S * N,                  # one exp per element
            bytes_accessed=2 * S * N * itemsize,    # one read + one write
        ),
    )(x2)

    return out.reshape(orig_shape)


if __name__ == "__main__":
    key = jax.random.PRNGKey(0)

    # Shape implied by the module's toy usage: seq=8, hidden=32.
    x_small = jax.random.normal(key, (8, 32), dtype=jnp.float32)
    out_small = jax.block_until_ready(softmax_dim0(x_small))
    ref_small = jnp.exp(x_small) / jnp.sum(jnp.exp(x_small), axis=0)
    assert out_small.shape == x_small.shape
    assert jnp.allclose(out_small, ref_small, atol=1e-5, rtol=1e-5)
    assert jnp.allclose(jnp.sum(out_small, axis=0), jnp.ones((32,)), atol=1e-4)

    # Non-multiple-of-128 hidden width exercises the masked boundary block
    # (no wrapper pad/slice) and the multi-tile grid path.
    key2 = jax.random.PRNGKey(1)
    x_big = jax.random.normal(key2, (8, 1000), dtype=jnp.float32)
    out_big = jax.block_until_ready(softmax_dim0(x_big))
    ref_big = jnp.exp(x_big) / jnp.sum(jnp.exp(x_big), axis=0)
    assert out_big.shape == x_big.shape
    assert jnp.allclose(out_big, ref_big, atol=1e-5, rtol=1e-5)
    assert jnp.allclose(jnp.sum(out_big, axis=0), jnp.ones((1000,)), atol=1e-4)

    print("KERNEL_OK")
</pallas_src>

<mosaic_0001>
module attributes {stable_mosaic.version = 11 : i64} {
  func.func @_softmax_dim0_kernel(%arg0: i32, %arg1: memref<8x32xf32, #tpu.memory_space<vmem>>, %arg2: memref<8x32xf32, #tpu.memory_space<vmem>>) attributes {dimension_semantics = [#tpu.dimension_semantics<parallel>], iteration_bounds = array<i64: 1>, scalar_prefetch = 0 : i64, scratch_operands = 0 : i64, tpu.core_type = #tpu.core_type<tc>, window_params = [{transform_indices = @transform_0, window_bounds = array<i64: 8, 32>}, {transform_indices = @transform_1, window_bounds = array<i64: 8, 32>}]} {
    %c0 = arith.constant 0 : index
    %c0_0 = arith.constant 0 : index
    %0 = vector.load %arg1[%c0, %c0_0] : memref<8x32xf32, #tpu.memory_space<vmem>>, vector<8x32xf32>
    %1 = math.exp %0 : vector<8x32xf32>
    %cst = arith.constant dense<0.000000e+00> : vector<32xf32>
    %2 = vector.multi_reduction <add>, %1, %cst [0] : vector<8x32xf32> to vector<32xf32>
    %3 = vector.shape_cast %2 : vector<32xf32> to vector<1x32xf32>
    %cst_1 = arith.constant 1.000000e+00 : f32
    %4 = vector.broadcast %cst_1 : f32 to vector<1x32xf32>
    %5 = arith.divf %4, %3 : vector<1x32xf32>
    %6 = vector.broadcast %5 : vector<1x32xf32> to vector<8x32xf32>
    %7 = arith.mulf %1, %6 : vector<8x32xf32>
    %c0_2 = arith.constant 0 : index
    %c0_3 = arith.constant 0 : index
    %8 = vector.load %arg2[%c0_2, %c0_3] : memref<8x32xf32, #tpu.memory_space<vmem>>, vector<8x32xf32>
    tpu.vector_store %arg2[%c0_2, %c0_3], %7 {strides = array<i32>} : memref<8x32xf32, #tpu.memory_space<vmem>>, vector<8x32xf32>,
    return
  }
  func.func @transform_0(%arg0: i32) -> (i32, i32) {
    %c0_i32 = arith.constant 0 : i32
    %c0_i32_0 = arith.constant 0 : i32
    return %c0_i32, %arg0 : i32, i32
  }
  func.func @transform_1(%arg0: i32) -> (i32, i32) {
    %c0_i32 = arith.constant 0 : i32
    %c0_i32_0 = arith.constant 0 : i32
    return %c0_i32, %arg0 : i32, i32
  }
}

</mosaic_0001>

<llo_original>
// kernel: tpu_custom_call.1
$region0: #{tpu_custom_call.1}
  #allocation0 [shape = 'u32[]', space=smem, size = 0x4, offset = 0x4, fixed_abs, tag = 'smem constant byte address 0x4 - core index']
  #allocation1 [shape = 'u32[72,128]{1,0:T(1,128)}', space=vmem, size = 0x9000, scoped, tag = 'internal scratch']
  %s0 = inlined_call_operand.hbm [shape: f32[8,32], index: 0, kind: input, shape index: {}]
  %s1 = inlined_call_operand.hbm [shape: f32[8,32], index: 1, kind: output, shape index: {}]
  %s2 = sld [smem:[#allocation0]]
  $region18: #{tpu_custom_call.1} parent=0
    _
  %s4 = ssub.s32 1, %s2
  %s5 = scalar_select 0, %s4, %s2
  $region1: #{tpu_custom_call.1} parent=0
    #allocation2 [shape = 'u8[4096]{0}', space=vmem, size = 0x1000, scoped, tag = 'input window, operand 0, single buffered']
    #allocation3 [shape = 's32[1]{0}', space=sflag, size = 0x4, scoped, tag = 'scoped memory for tpu_custom_call.1']
    #allocation4 [shape = 's32[1]{0}', space=sflag, size = 0x4, scoped, tag = 'scoped memory for tpu_custom_call.1']
    #allocation5 [shape = 'u8[4096]{0}', space=vmem, size = 0x1000, scoped, tag = 'output window, operand 0, single buffered']
    %6 = vsyncpa [#allocation3], 0
    %7 = vsyncpa [#allocation4], 0
    // Predicated region
    $region2: #{tpu_custom_call.1} parent=1 // pred_check
      _
    $region3: #{tpu_custom_call.1} parent=1 // pred_check_branch
      %9 = sbr.rel (0) target = $region5
    $region4: #{tpu_custom_call.1} parent=1 // pred_region
      %11 = vsyncadd [#allocation3], 0
      %s13 = sshll.u32 %s0, 4
      %s14 = int_to_ptr.hbm [resolvable:$true] %s13
      %s15 = sshll.u32 [#allocation2], 4
      %s16 = int_to_ptr.vmem [resolvable:$true] %s15
      %18 = dma.hbm_to_vmem [thread:$0]  %s14, 128, %s16, [#allocation3]
    $region5: #{tpu_custom_call.1} parent=1 // pred_fallthru
      _
    // Predicated region
    $region6: #{tpu_custom_call.1} parent=1 // pred_check
      _
    $region7: #{tpu_custom_call.1} parent=1 // pred_check_branch
      %20 = sbr.rel (0) target = $region9
    $region8: #{tpu_custom_call.1} parent=1 // pred_region
      %22 = dma.done [#allocation3], 128
    $region9: #{tpu_custom_call.1} parent=1 // pred_fallthru
      _
    %v23 = vld [vmem:[#allocation2] sm:$0xff]
    %v24 = vmul.f32 %v23, 1.442695
    %v25 = vpow.pop %v24
    %vm26 = vcmask 261120
    %v27 = vsel %vm26, %v25, 0.0
    %v28 = vrot.slane %v27, 4
    %v29 = vadd.f32 %v27, %v28
    %v30 = vrot.slane %v29, 2
    %v31 = vadd.f32 %v29, %v30
    %v32 = vrot.slane %v31, 1
    %v33 = vadd.f32 %v31, %v32
    %v34 = vrcp.pop %v33
    %v35 = vmul.f32 %v33, %v34
    %v36 = vsub.f32 1.0, %v35
    %v37 = vmul.f32 %v34, %v36
    %v38 = vadd.f32 %v34, %v37
    %vm39 = vweird.f32 %v33
    %vm40 = vweird.f32 %v34
    %vm41 = vmor %vm39, %vm40
    %v42 = vsel %vm41, %v34, %v38
    %v43 = vand.u32 2147483647, %v33
    %vm44 = vcmp.eq.f32.partialorder %v43, 8.507059e+37
    %v45 = vand.u32 %v33, 2147483648
    %v46 = vor.u32 1.1754944e-38, %v45
    %v47 = vsel %vm44, %v46, %v42
    %v48 = vmul.f32 1.0, %v47
    %v49 = vmul.f32 %v25, %v48
    %50 = vst.msk [vmem:[#allocation5] sm:$0xff] %vm26, %v49
    // Predicated region
    $region10: #{tpu_custom_call.1} parent=1 // pred_check
      _
    $region11: #{tpu_custom_call.1} parent=1 // pred_check_branch
      %52 = sbr.rel (0) target = $region13
    $region12: #{tpu_custom_call.1} parent=1 // pred_region
      %54 = vsyncadd [#allocation4], 0
      %s56 = sshll.u32 [#allocation5], 4
      %s57 = int_to_ptr.vmem [resolvable:$true] %s56
      %s58 = sshll.u32 %s1, 4
      %s59 = int_to_ptr.hbm [resolvable:$true] %s58
      %61 = dma.vmem_to_hbm [thread:$0]  %s57, 128, %s59, [#allocation4]
    $region13: #{tpu_custom_call.1} parent=1 // pred_fallthru
      _
    // Predicated region
    $region14: #{tpu_custom_call.1} parent=1 // pred_check
      _
    $region15: #{tpu_custom_call.1} parent=1 // pred_check_branch
      %63 = sbr.rel (0) target = $region17
    $region16: #{tpu_custom_call.1} parent=1 // pred_region
      %65 = dma.done [#allocation4], 128
    $region17: #{tpu_custom_call.1} parent=1 // pred_fallthru
      _
    %66 = vsyncpa [#allocation3], 1
    %67 = vsyncpa [#allocation4], 1

</llo_original>
